<compile_context>
chip_gen: v7x
topology: tpu7x:2x2x1
jax: 0.10.0
libtpu: 0.0.40
codegen_flags: <defaults>
</compile_context>

<pallas_src>
import functools

import jax
import jax.numpy as jnp
from jax import lax
from jax.experimental import pallas as pl
from jax.experimental.pallas import tpu as pltpu

MARGIN = 0.1
ALPHA = 32.0
NUM_CLASSES = 16   # self.num_classes is never assigned in the reference __init__.

# Tile ceilings (sized against v7x's 64 MiB physical VMEM; also fit v5e/v6e).
TB_MAX = 1024      # batch tile (sublanes)
TC_MAX = 2048      # class tile (lanes), multiple of 128

_NEG_BIG = -1.0e30  # masked exponent argument -> exp() == 0 exactly


def proxy_anchor_kernel(label_ref, sim_ref, out_ref, *, margin, alpha,
                        b_total, c_total, nbs,
                        need_row_mask, need_lane_mask):
    """Accumulates per-proxy sums into out_ref (2, tc):
         row 0: sum_b 1[label_b==c] * exp(-alpha * (sim[b,c] - margin))   (P+)
         row 1: sum_b 1[label_b!=c] * exp( alpha * (sim[b,c] + margin))   (N)
    """
    s = pl.program_id(0)           # batch split axis   ("parallel", v7x megacore)
    ci = pl.program_id(1)          # class tile axis    ("parallel")
    bi = pl.program_id(2)          # batch tile axis    ("arbitrary", reduction)
    tb, tc = sim_ref.shape

    @pl.when(bi == 0)
    def _init():
        out_ref[...] = jnp.zeros_like(out_ref)

    sim = sim_ref[...].astype(jnp.float32)                         # (tb, tc)
    lane_ids = lax.broadcasted_iota(jnp.int32, (tb, tc), 1)

    # Fold the class-tile offset (and the row-validity mask) into the (tb, 1)
    # label instead of the (tb, tc) iota -> zero extra per-element work.
    local_label = label_ref[...] - ci * tc                         # (tb, 1)
    if need_row_mask:
        row_ids = ((s * nbs + bi) * tb
                   + lax.broadcasted_iota(jnp.int32, (tb, 1), 0))  # global rows
        local_label = jnp.where(row_ids < b_total, local_label, -1)
    is_pos = lane_ids == local_label                               # (tb, tc)

    # Positive path: one transcendental per ROW; garbage lanes/rows are never
    # selected (select drops NaN/inf in the unselected branch).
    s_pos = jnp.sum(jnp.where(is_pos, sim, 0.0), axis=1, keepdims=True)  # (tb,1)
    pos_exp_row = jnp.exp(-alpha * (s_pos - margin))                     # (tb,1)
    pos_w = jnp.where(is_pos, pos_exp_row, 0.0)                          # (tb,tc)

    # Negative path: mask is applied to the exponent ARGUMENT (no 0*inf NaN),
    # and also kills ragged-tail garbage rows / lanes (exp(_NEG_BIG) == 0).
    neg_ok = jnp.logical_not(is_pos)
    if need_row_mask:
        neg_ok = jnp.logical_and(neg_ok, row_ids < b_total)
    if need_lane_mask:
        neg_ok = jnp.logical_and(neg_ok, lane_ids < (c_total - ci * tc))
    neg_exp = jnp.exp(jnp.where(neg_ok, alpha * (sim + margin), _NEG_BIG))

    # Column reductions on the MXU (idle otherwise): ones(1,tb) @ RHS.
    ones_row = jnp.ones((1, tb), jnp.float32)
    p_contrib = jnp.dot(ones_row, pos_w,
                        precision=lax.Precision.HIGHEST,
                        preferred_element_type=jnp.float32)        # (1, tc)
    n_contrib = jnp.dot(ones_row, neg_exp,
                        precision=lax.Precision.HIGHEST,
                        preferred_element_type=jnp.float32)        # (1, tc)

    # Single dense accumulate into the VMEM-resident (2, tc) slab.
    out_ref[...] += jnp.concatenate([p_contrib, n_contrib], axis=0)


def proxy_anchor_forward(similarity, label, *, num_classes=NUM_CLASSES,
                         margin=MARGIN, alpha=ALPHA,
                         tb_max=TB_MAX, tc_max=TC_MAX, split=2):
    b, c = similarity.shape
    assert c == num_classes

    label_col = label.astype(jnp.int32).reshape(b, 1)

    # Batch tiling: full-dim block when it fits (no padding ever).
    if b <= tb_max:
        tb, nb = b, 1
    else:
        tb = tb_max
        nb = pl.cdiv(b, tb)
    # Class tiling: full-dim block when it fits (no padding ever).
    if c <= tc_max:
        tc, nc = c, 1
    else:
        tc = tc_max
        nc = pl.cdiv(c, tc)
    c_out = nc * tc

    # Megacore batch split (v7x: 2 TCs). Harmless on 1-TC chips (sequential).
    s_split = split if nb >= split else 1
    nbs = pl.cdiv(nb, s_split)

    need_row_mask = (s_split * nbs * tb) > b   # ragged batch tail / clamped dup block
    need_lane_mask = c_out > c                 # ragged class tail

    kernel = functools.partial(
        proxy_anchor_kernel, margin=float(margin), alpha=float(alpha),
        b_total=b, c_total=c, nbs=nbs,
        need_row_mask=need_row_mask, need_lane_mask=need_lane_mask)

    nb_last = nb - 1

    def lab_map(s, ci, bi):
        return (jnp.minimum(s * nbs + bi, nb_last), 0)

    def sim_map(s, ci, bi):
        return (jnp.minimum(s * nbs + bi, nb_last), ci)

    out = pl.pallas_call(
        kernel,
        out_shape=jax.ShapeDtypeStruct((s_split, 2, c_out), jnp.float32),
        grid_spec=pltpu.PrefetchScalarGridSpec(
            num_scalar_prefetch=0,
            grid=(s_split, nc, nbs),
            in_specs=[
                # labels: blocked only along batch -> reused across class tiles
                pl.BlockSpec((tb, 1), lab_map),
                # similarity streamed once, in its native dtype (bf16 or f32)
                pl.BlockSpec((tb, tc), sim_map),
            ],
            # same output block across the batch axis -> VMEM-resident accumulator
            out_specs=pl.BlockSpec((None, 2, tc), lambda s, ci, bi: (s, 0, ci)),
        ),
        compiler_params=pltpu.CompilerParams(
            dimension_semantics=("parallel", "parallel", "arbitrary"),
            vmem_limit_bytes=32 * 1024 * 1024),
        cost_estimate=pl.CostEstimate(
            flops=12 * b * c,
            transcendentals=b * c + b,
            bytes_accessed=int(b * c * similarity.dtype.itemsize
                               + b * 4 + s_split * 2 * c_out * 4)),
    )(label_col, similarity)

    acc = jnp.sum(out, axis=0)              # combine the per-split accumulators
    p_sum = acc[0, :num_classes]
    n_sum = acc[1, :num_classes]

    # pos_count is label-only -> hoisted out of the kernel (O(B) scatter-add).
    pos_count = jnp.zeros((num_classes,), jnp.float32).at[
        label.astype(jnp.int32)].add(1.0)

    # TODO(synk): the reference forward() is truncated after pos_exp/neg_exp
    # (it returns nothing); we complete it with the canonical Proxy-Anchor
    # loss reduction here as plain-JAX glue.
    valid = (pos_count > 0).astype(jnp.float32)
    num_valid_proxies = jnp.maximum(jnp.sum(valid), 1.0)
    pos_term = jnp.sum(jnp.log1p(p_sum) * valid) / num_valid_proxies
    neg_term = jnp.sum(jnp.log1p(n_sum)) / num_classes
    return pos_term + neg_term


def proxy_anchor_reference(similarity, label, *, num_classes,
                           margin=MARGIN, alpha=ALPHA):
    """Pure-JAX reference (same completed reduction) for correctness checks."""
    sim = similarity.astype(jnp.float32)
    one_hot = jax.nn.one_hot(label, num_classes, dtype=jnp.float32)
    pos_exp = jnp.exp(-alpha * (sim - margin))
    neg_exp = jnp.exp(alpha * (sim + margin))
    p_sum = jnp.sum(one_hot * pos_exp, axis=0)
    n_sum = jnp.sum((1.0 - one_hot) * neg_exp, axis=0)
    cnt = jnp.sum(one_hot, axis=0)
    valid = (cnt > 0).astype(jnp.float32)
    nvp = jnp.maximum(jnp.sum(valid), 1.0)
    return (jnp.sum(jnp.log1p(p_sum) * valid) / nvp
            + jnp.sum(jnp.log1p(n_sum)) / num_classes)


if __name__ == "__main__":
    key = jax.random.PRNGKey(0)
    k1, k2, k3, k4, k5, k6 = jax.random.split(key, 6)

    # Case 1: f32 input, module's implied config (batch=8, num_classes=16).
    b1, c1 = 8, NUM_CLASSES
    sim1 = jax.random.uniform(k1, (b1, c1), jnp.float32, -1.0, 1.0)
    lab1 = jax.random.randint(k2, (b1,), 0, c1, dtype=jnp.int32)
    loss1 = proxy_anchor_forward(sim1, lab1, num_classes=c1)
    jax.block_until_ready(loss1)
    assert loss1.shape == () and bool(jnp.isfinite(loss1))
    ref1 = proxy_anchor_reference(sim1, lab1, num_classes=c1)
    assert jnp.allclose(loss1, ref1, rtol=1e-4, atol=1e-5), (loss1, ref1)

    # Case 2: bf16 input, non-(8,128)-aligned shapes, no padding anywhere.
    b2, c2 = 24, 40
    sim2 = jax.random.uniform(k3, (b2, c2), jnp.float32,
                              -1.0, 1.0).astype(jnp.bfloat16)
    lab2 = jax.random.randint(k4, (b2,), 0, c2, dtype=jnp.int32)
    loss2 = proxy_anchor_forward(sim2, lab2, num_classes=c2)
    jax.block_until_ready(loss2)
    ref2 = proxy_anchor_reference(sim2, lab2, num_classes=c2)
    assert jnp.allclose(loss2, ref2, rtol=1e-3, atol=1e-4), (loss2, ref2)

    # Case 3: forced small batch tile -> exercises the 2-way batch split
    # (megacore path), block-index clamping and the ragged-row masking.
    b3, c3 = 20, 16
    sim3 = jax.random.uniform(k5, (b3, c3), jnp.float32, -1.0, 1.0)
    lab3 = jax.random.randint(k6, (b3,), 0, c3, dtype=jnp.int32)
    loss3 = proxy_anchor_forward(sim3, lab3, num_classes=c3, tb_max=8)
    jax.block_until_ready(loss3)
    ref3 = proxy_anchor_reference(sim3, lab3, num_classes=c3)
    assert jnp.allclose(loss3, ref3, rtol=1e-4, atol=1e-5), (loss3, ref3)

    print("KERNEL_OK")
</pallas_src>

<mosaic_0001>
module attributes {stable_mosaic.version = 11 : i64} {
  func.func @proxy_anchor_kernel(%arg0: i32, %arg1: i32, %arg2: i32, %arg3: memref<8x1xi32, #tpu.memory_space<vmem>>, %arg4: memref<8x16xf32, #tpu.memory_space<vmem>>, %arg5: memref<1x2x16xf32, #tpu.memory_space<vmem>>) attributes {dimension_semantics = [#tpu.dimension_semantics<parallel>, #tpu.dimension_semantics<parallel>, #tpu.dimension_semantics<arbitrary>], iteration_bounds = array<i64: 1, 1, 1>, scalar_prefetch = 0 : i64, scratch_operands = 0 : i64, tpu.core_type = #tpu.core_type<tc>, window_params = [{transform_indices = @transform_0, window_bounds = array<i64: 8, 1>}, {transform_indices = @transform_1, window_bounds = array<i64: 8, 16>}, {transform_indices = @transform_2, window_bounds = array<i64: 1, 2, 16>}]} {
    %c0_i32 = arith.constant 0 : i32
    %0 = arith.cmpi eq, %arg2, %c0_i32 : i32
    %1 = arith.extui %0 : i1 to i32
    %c0_i32_0 = arith.constant 0 : i32
    %2 = arith.cmpi ne, %1, %c0_i32_0 : i32
    scf.if %2 {
      %cst_21 = arith.constant 0.000000e+00 : f32
      %42 = vector.broadcast %cst_21 : f32 to vector<2x16xf32>
      %c0_22 = arith.constant 0 : index
      %c0_23 = arith.constant 0 : index
      %c0_24 = arith.constant 0 : index
      %43 = vector.load %arg5[%c0_22, %c0_23, %c0_24] : memref<1x2x16xf32, #tpu.memory_space<vmem>>, vector<1x2x16xf32>
      %44 = vector.shape_cast %43 : vector<1x2x16xf32> to vector<2x16xf32>
      %45 = vector.shape_cast %42 : vector<2x16xf32> to vector<1x2x16xf32>
      tpu.vector_store %arg5[%c0_22, %c0_23, %c0_24], %45 {strides = array<i32>} : memref<1x2x16xf32, #tpu.memory_space<vmem>>, vector<1x2x16xf32>,
    } else {
    }
    %c0 = arith.constant 0 : index
    %c0_1 = arith.constant 0 : index
    %3 = vector.load %arg4[%c0, %c0_1] : memref<8x16xf32, #tpu.memory_space<vmem>>, vector<8x16xf32>
    %4 = tpu.iota {dimensions = array<i32: 1>} : vector<8x16xi32>
    %c0_2 = arith.constant 0 : index
    %c0_3 = arith.constant 0 : index
    %5 = vector.load %arg3[%c0_2, %c0_3] : memref<8x1xi32, #tpu.memory_space<vmem>>, vector<8x1xi32>
    %c16_i32 = arith.constant 16 : i32
    %6 = arith.muli %arg1, %c16_i32 : i32
    %7 = vector.broadcast %6 : i32 to vector<8x1xi32>
    %8 = arith.subi %5, %7 : vector<8x1xi32>
    %9 = vector.broadcast %8 : vector<8x1xi32> to vector<8x16xi32>
    %10 = arith.cmpi eq, %4, %9 : vector<8x16xi32>
    %cst = arith.constant 0.000000e+00 : f32
    %11 = vector.broadcast %cst : f32 to vector<8x16xf32>
    %12 = arith.select %10, %3, %11 : vector<8x16xi1>, vector<8x16xf32>
    %cst_4 = arith.constant dense<0.000000e+00> : vector<8xf32>
    %13 = vector.multi_reduction <add>, %12, %cst_4 [1] : vector<8x16xf32> to vector<8xf32>
    %14 = vector.shape_cast %13 : vector<8xf32> to vector<8x1xf32>
    %cst_5 = arith.constant 1.000000e-01 : f32
    %15 = vector.broadcast %cst_5 : f32 to vector<8x1xf32>
    %16 = arith.subf %14, %15 : vector<8x1xf32>
    %cst_6 = arith.constant -3.200000e+01 : f32
    %17 = vector.broadcast %cst_6 : f32 to vector<8x1xf32>
    %18 = arith.mulf %17, %16 : vector<8x1xf32>
    %19 = math.exp %18 : vector<8x1xf32>
    %cst_7 = arith.constant 0.000000e+00 : f32
    %20 = vector.shape_cast %19 : vector<8x1xf32> to vector<8x1xf32>
    %21 = vector.broadcast %20 : vector<8x1xf32> to vector<8x16xf32>
    %22 = vector.broadcast %cst_7 : f32 to vector<8x16xf32>
    %23 = arith.select %10, %21, %22 : vector<8x16xi1>, vector<8x16xf32>
    %cst_8 = arith.constant dense<true> : vector<8x16xi1>
    %24 = arith.xori %10, %cst_8 : vector<8x16xi1>
    %cst_9 = arith.constant 1.000000e-01 : f32
    %25 = vector.broadcast %cst_9 : f32 to vector<8x16xf32>
    %26 = arith.addf %3, %25 : vector<8x16xf32>
    %cst_10 = arith.constant 3.200000e+01 : f32
    %27 = vector.broadcast %cst_10 : f32 to vector<8x16xf32>
    %28 = arith.mulf %27, %26 : vector<8x16xf32>
    %cst_11 = arith.constant -1.000000e+30 : f32
    %29 = vector.broadcast %cst_11 : f32 to vector<8x16xf32>
    %30 = arith.select %24, %28, %29 : vector<8x16xi1>, vector<8x16xf32>
    %31 = math.exp %30 : vector<8x16xf32>
    %cst_12 = arith.constant 1.000000e+00 : f32
    %32 = vector.broadcast %cst_12 : f32 to vector<1x8xf32>
    %cst_13 = arith.constant dense<0.000000e+00> : vector<1x16xf32>
    %33 = tpu.matmul %32, %23, %cst_13 {dimension_numbers = #tpu.dot_dimension_numbers<[1], [0], [0], [1], [0, 0, 1, 1], [], []>, precision = #tpu.contract_precision<fp32>} : vector<1x8xf32>, vector<8x16xf32>, vector<1x16xf32> -> vector<1x16xf32>
    %cst_14 = arith.constant dense<0.000000e+00> : vector<1x16xf32>
    %34 = tpu.matmul %32, %31, %cst_14 {dimension_numbers = #tpu.dot_dimension_numbers<[1], [0], [0], [1], [0, 0, 1, 1], [], []>, precision = #tpu.contract_precision<fp32>} : vector<1x8xf32>, vector<8x16xf32>, vector<1x16xf32> -> vector<1x16xf32>
    %c0_15 = arith.constant 0 : index
    %c0_16 = arith.constant 0 : index
    %c0_17 = arith.constant 0 : index
    %35 = vector.load %arg5[%c0_15, %c0_16, %c0_17] : memref<1x2x16xf32, #tpu.memory_space<vmem>>, vector<1x2x16xf32>
    %36 = vector.shape_cast %35 : vector<1x2x16xf32> to vector<2x16xf32>
    %37 = tpu.concatenate %33, %34 in 0 : vector<1x16xf32>, vector<1x16xf32> -> vector<2x16xf32>
    %38 = arith.addf %36, %37 : vector<2x16xf32>
    %c0_18 = arith.constant 0 : index
    %c0_19 = arith.constant 0 : index
    %c0_20 = arith.constant 0 : index
    %39 = vector.load %arg5[%c0_18, %c0_19, %c0_20] : memref<1x2x16xf32, #tpu.memory_space<vmem>>, vector<1x2x16xf32>
    %40 = vector.shape_cast %39 : vector<1x2x16xf32> to vector<2x16xf32>
    %41 = vector.shape_cast %38 : vector<2x16xf32> to vector<1x2x16xf32>
    tpu.vector_store %arg5[%c0_18, %c0_19, %c0_20], %41 {strides = array<i32>} : memref<1x2x16xf32, #tpu.memory_space<vmem>>, vector<1x2x16xf32>,
    return
  }
  func.func @transform_0(%arg0: i32, %arg1: i32, %arg2: i32) -> (i32, i32) {
    %c1_i32 = arith.constant 1 : i32
    %0 = arith.muli %arg0, %c1_i32 : i32
    %1 = arith.addi %0, %arg2 : i32
    %c0_i32 = arith.constant 0 : i32
    %2 = arith.minsi %1, %c0_i32 : i32
    %c0_i32_0 = arith.constant 0 : i32
    %c0_i32_1 = arith.constant 0 : i32
    return %2, %c0_i32_0 : i32, i32
  }
  func.func @transform_1(%arg0: i32, %arg1: i32, %arg2: i32) -> (i32, i32) {
    %c1_i32 = arith.constant 1 : i32
    %0 = arith.muli %arg0, %c1_i32 : i32
    %1 = arith.addi %0, %arg2 : i32
    %c0_i32 = arith.constant 0 : i32
    %2 = arith.minsi %1, %c0_i32 : i32
    %c0_i32_0 = arith.constant 0 : i32
    return %2, %arg1 : i32, i32
  }
  func.func @transform_2(%arg0: i32, %arg1: i32, %arg2: i32) -> (i32, i32, i32) {
    %c0_i32 = arith.constant 0 : i32
    %c0_i32_0 = arith.constant 0 : i32
    return %arg0, %c0_i32, %arg1 : i32, i32, i32
  }
}

</mosaic_0001>

<llo_original>
// kernel: tpu_custom_call.1
$region0: #{tpu_custom_call.1}
  #allocation0 [shape = 'u32[]', space=smem, size = 0x4, offset = 0x4, fixed_abs, tag = 'smem constant byte address 0x4 - core index']
  #allocation1 [shape = 'u32[144,128]{1,0:T(1,128)}', space=vmem, size = 0x12000, scoped, tag = 'internal scratch']
  %s0 = inlined_call_operand.vmem [shape: s32[8,1], index: 0, kind: input, shape index: {}]
  %s1 = inlined_call_operand.vmem [shape: f32[8,16], index: 1, kind: input, shape index: {}]
  %s2 = inlined_call_operand.hbm [shape: f32[1,2,16], index: 2, kind: output, shape index: {}]
  %s3 = sld [smem:[#allocation0]]
  $region22: #{tpu_custom_call.1} parent=0
    _
  %s5 = ssub.s32 1, %s3
  %s6 = scalar_select 0, %s5, %s3
  $region1: #{tpu_custom_call.1} parent=0
    #allocation2 [shape = 'u8[1024]{0}', space=vmem, size = 0x400, scoped, tag = 'output window, operand 0, single buffered']
    #allocation3 [shape = 's32[1]{0}', space=sflag, size = 0x4, scoped, tag = 'scoped memory for tpu_custom_call.1']
    %7 = vsyncpa [#allocation3], 0
    // Predicated region
    $region2: #{tpu_custom_call.1} parent=1 // pred_check
      _
    $region3: #{tpu_custom_call.1} parent=1 // pred_check_branch
      %9 = sbr.rel (0) target = $region5
    $region4: #{tpu_custom_call.1} parent=1 // pred_region
      %s10 = sadd.s32 0, 0
      %p11 = scmp.lt.s32.totalorder %s10, 0
      %s12 = scalar_select %p11, %s10, 0
      %p13 = scmp.lt.s32.totalorder %s12, 0
      %s14 = scalar_select %p13, %s12, 0
      %s15 = smul.addr %s14, 8
      %s16 = scalar_lea.vmem %s0, %s15
      %s17 = sadd.s32 0, 0
      %p18 = scmp.lt.s32.totalorder %s17, 0
      %s19 = scalar_select %p18, %s17, 0
    $region5: #{tpu_custom_call.1} parent=1 // pred_fallthru
      _
    // Predicated region
    $region6: #{tpu_custom_call.1} parent=1 // pred_check
      _
    $region7: #{tpu_custom_call.1} parent=1 // pred_check_branch
      %21 = sbr.rel (0) target = $region9
    $region8: #{tpu_custom_call.1} parent=1 // pred_region
      %s22 = sadd.s32 0, 0
      %p23 = scmp.lt.s32.totalorder %s22, 0
      %s24 = scalar_select %p23, %s22, 0
      %p25 = scmp.lt.s32.totalorder %s24, 0
      %s26 = scalar_select %p25, %s24, 0
      %s27 = smul.addr %s26, 8
      %s28 = scalar_lea.vmem %s1, %s27
      %s29 = sadd.s32 0, 0
      %p30 = scmp.lt.s32.totalorder %s29, 0
      %s31 = scalar_select %p30, %s29, 0
    $region9: #{tpu_custom_call.1} parent=1 // pred_fallthru
      _
    %s32 = sadd.s32 0, 0
    %p33 = scmp.lt.s32.totalorder %s32, 0
    %s34 = scalar_select %p33, %s32, 0
    %p35 = scmp.lt.s32.totalorder %s34, 0
    %s36 = scalar_select %p35, %s34, 0
    %s37 = smul.addr %s36, 8
    %s38 = scalar_lea.vmem %s0, %s37
    %s39 = sadd.s32 0, 0
    %p40 = scmp.lt.s32.totalorder %s39, 0
    %s41 = scalar_select %p40, %s39, 0
    %p42 = scmp.lt.s32.totalorder %s41, 0
    %s43 = scalar_select %p42, %s41, 0
    %s44 = smul.addr %s43, 8
    %s45 = scalar_lea.vmem %s1, %s44
    %s46 = sadd.s32 0, 0
    %p47 = scmp.lt.s32.totalorder %s46, 0
    %s48 = scalar_select %p47, %s46, 0
    %p49 = scmp.lt.s32.totalorder %s48, 0
    %s50 = scalar_select %p49, %s48, 0
    %s51 = smul.addr %s50, 8
    %s52 = scalar_lea.vmem %s0, %s51
    %s53 = sadd.s32 0, 0
    %p54 = scmp.lt.s32.totalorder %s53, 0
    %s55 = scalar_select %p54, %s53, 0
    %s56 = sadd.s32 0, 0
    %p57 = scmp.lt.s32.totalorder %s56, 0
    %s58 = scalar_select %p57, %s56, 0
    %p59 = scmp.lt.s32.totalorder %s58, 0
    %s60 = scalar_select %p59, %s58, 0
    %s61 = smul.addr %s60, 8
    %s62 = scalar_lea.vmem %s1, %s61
    %s63 = sadd.s32 0, 0
    %p64 = scmp.lt.s32.totalorder %s63, 0
    %s65 = scalar_select %p64, %s63, 0
    %p66 = scmp.eq.s32.totalorder 0, 0
    // Predicated region
    $region10: #{tpu_custom_call.1} parent=1 // pred_check
      %p67 = pneg %p66
    $region11: #{tpu_custom_call.1} parent=1 // pred_check_branch
      %69 = sbr.rel (%p67) target = $region13
    $region12: #{tpu_custom_call.1} parent=1 // pred_region
      %vm70 = vcmask 123904
      %71 = vst.msk [vmem:[#allocation2] sm:$0x3] %vm70, 0.0
    $region13: #{tpu_custom_call.1} parent=1 // pred_fallthru
      _
    %v72 = vld [vmem:[%s62] sm:$0xff]
    %v73 = vlaneseq
    %v74 = vand.u32 %v73, 127
    %v75 = vld [vmem:[%s52] sm:$0xff]
    %s76 = smul.u32 0, 16
    %v77 = vstv %s76
    %v78 = vsub.s32 %v75, %v77
    %79 = vset.pattern.permute.xlu0 0
    %80 = vperm.xlu0 %79, %v78
    %v81 = vpop.permute.xlu0 %80
    %vm82 = vcmp.eq.s32.totalorder %v74, %v81
    %v83 = vsel %vm82, %v72, 0.0
    %vm84 = vcmask 130048
    %v85 = vsel %vm84, %v83, 0.0
    %86 = vadd.xlane.f32.xlu0 %v85
    %v87 = vpop.xlane.xlu0 %86
    %v88 = vsub.f32 %v87, 0.1
    %v89 = vmul.f32 %v88, -32.0
    %v90 = vmul.f32 %v89, 1.442695
    %v91 = vpow.pop %v90
    %v92 = vsel %vm82, %v91, 0.0
    %vm93 = vmxor %vm82, 1
    %v94 = vadd.f32 %v72, 0.1
    %v95 = vmul.f32 %v94, 32.0
    %v96 = vsel %vm93, %v95, -1e+30
    %v97 = vmul.f32 %v96, 1.442695
    %v98 = vpow.pop %v97
    %vm99 = vcmask 64512
    %v101 = vsel %vm99, 1.0, 0
    %103 = vmatprep.subr.mxu0 0.0
    %v104 = vand.u32 %v92, 4294901760
    %105 = vmatpush1.msra.mxu0 %v104
    %106 = vmatprep.subr.mxu0 0.0
    %107 = vmatpush1.msra.mxu0 0.0
    %108 = vmatprep.subr.mxu0 0.0
    %109 = vmatpush1.msra.mxu0 0.0
    %110 = vmatprep.subr.mxu0 0.0
    %111 = vmatpush1.msra.mxu0 0.0
    %112 = vmatprep.subr.mxu0 0.0
    %113 = vmatpush1.msra.mxu0 0.0
    %114 = vmatprep.subr.mxu0 0.0
    %115 = vmatpush1.msra.mxu0 0.0
    %116 = vmatprep.subr.mxu0 0.0
    %117 = vmatpush1.msra.mxu0 0.0
    %118 = vmatprep.subr.mxu0 0.0
    %119 = vmatpush1.msra.mxu0 0.0
    %120 = vmatprep.subr.mxu0 0.0
    %121 = vmatpush1.msra.mxu0 0.0
    %122 = vmatprep.subr.mxu0 0.0
    %123 = vmatpush1.msra.mxu0 0.0
    %124 = vmatprep.subr.mxu0 0.0
    %125 = vmatpush1.msra.mxu0 0.0
    %126 = vmatprep.subr.mxu0 0.0
    %127 = vmatpush1.msra.mxu0 0.0
    %128 = vmatprep.subr.mxu0 0.0
    %129 = vmatpush1.msra.mxu0 0.0
    %130 = vmatprep.subr.mxu0 0.0
    %131 = vmatpush1.msra.mxu0 0.0
    %132 = vmatprep.subr.mxu0 0.0
    %133 = vmatpush1.msra.mxu0 0.0
    %134 = vmatprep.subr.mxu0 0.0
    %135 = vmatpush1.msra.mxu0 0.0
    %136 = vmatprep.subr.mxu0 0.0
    %137 = vmatpush1.msra.mxu0 0.0
    %138 = vmatprep.subr.mxu0 0.0
    %139 = vmatpush1.msra.mxu0 0.0
    %140 = vmatprep.subr.mxu0 0.0
    %141 = vmatpush1.msra.mxu0 0.0
    %142 = vmatprep.subr.mxu0 0.0
    %143 = vmatpush1.msra.mxu0 0.0
    %144 = vmatprep.subr.mxu0 0.0
    %145 = vmatpush1.msra.mxu0 0.0
    %146 = vmatprep.subr.mxu0 0.0
    %147 = vmatpush1.msra.mxu0 0.0
    %148 = vmatprep.subr.mxu0 0.0
    %149 = vmatpush1.msra.mxu0 0.0
    %150 = vmatprep.subr.mxu0 0.0
    %151 = vmatpush1.msra.mxu0 0.0
    %152 = vmatprep.subr.mxu0 0.0
    %153 = vmatpush1.msra.mxu0 0.0
    %154 = vmatprep.subr.mxu0 0.0
    %155 = vmatpush1.msra.mxu0 0.0
    %156 = vmatprep.subr.mxu0 0.0
    %157 = vmatpush1.msra.mxu0 0.0
    %158 = vmatprep.subr.mxu0 0.0
    %159 = vmatpush1.msra.mxu0 0.0
    %160 = vmatprep.subr.mxu0 0.0
    %161 = vmatpush1.msra.mxu0 0.0
    %162 = vmatprep.subr.mxu0 0.0
    %163 = vmatpush1.msra.mxu0 0.0
    %164 = vmatprep.subr.mxu0 0.0
    %165 = vmatpush1.msra.mxu0 0.0
    %166 = vmatprep.subr.mxu0 0.0
    %167 = vmatpush1.msra.mxu0 0.0
    %168 = vmatprep.mubr.f32.mxu0 0.0
    %v169 = vand.u32 %v101, 4294901760
    %v170 = vsub.f32 %v101, %v169
    %v171 = vand.u32 %v170, 4294901760
    %v172 = vsub.f32 %v170, %v171
    %v173 = vand.u32 %v172, 4294901760
    %174 = vmatmul.mubr.f32.gmra.mrb[0].mxu0 %v173
    %v175 = vpop.f32.mrb[0].mxu0
    %v176 = vadd.f32 0.0, %v175
    %v177 = vpop.f32.mrb[0].mxu0
    %178 = vdwg.mxu0
    %179 = vmatprep.subr.mxu0 0.0
    %v180 = vand.u32 %v92, 4294901760
    %v181 = vsub.f32 %v92, %v180
    %v182 = vand.u32 %v181, 4294901760
    %v183 = vsub.f32 %v181, %v182
    %v184 = vand.u32 %v183, 4294901760
    %185 = vmatpush1.msra.mxu0 %v184
    %186 = vmatprep.subr.mxu0 0.0
    %187 = vmatpush1.msra.mxu0 0.0
    %188 = vmatprep.subr.mxu0 0.0
    %189 = vmatpush1.msra.mxu0 0.0
    %190 = vmatprep.subr.mxu0 0.0
    %191 = vmatpush1.msra.mxu0 0.0
    %192 = vmatprep.subr.mxu0 0.0
    %193 = vmatpush1.msra.mxu0 0.0
    %194 = vmatprep.subr.mxu0 0.0
    %195 = vmatpush1.msra.mxu0 0.0
    %196 = vmatprep.subr.mxu0 0.0
    %197 = vmatpush1.msra.mxu0 0.0
    %198 = vmatprep.subr.mxu0 0.0
    %199 = vmatpush1.msra.mxu0 0.0
    %200 = vmatprep.subr.mxu0 0.0
    %201 = vmatpush1.msra.mxu0 0.0
    %202 = vmatprep.subr.mxu0 0.0
    %203 = vmatpush1.msra.mxu0 0.0
    %204 = vmatprep.subr.mxu0 0.0
    %205 = vmatpush1.msra.mxu0 0.0
    %206 = vmatprep.subr.mxu0 0.0
    %207 = vmatpush1.msra.mxu0 0.0
    %208 = vmatprep.subr.mxu0 0.0
    %209 = vmatpush1.msra.mxu0 0.0
    %210 = vmatprep.subr.mxu0 0.0
    %211 = vmatpush1.msra.mxu0 0.0
    %212 = vmatprep.subr.mxu0 0.0
    %213 = vmatpush1.msra.mxu0 0.0
    %214 = vmatprep.subr.mxu0 0.0
    %215 = vmatpush1.msra.mxu0 0.0
    %216 = vmatprep.subr.mxu0 0.0
    %217 = vmatpush1.msra.mxu0 0.0
    %218 = vmatprep.subr.mxu0 0.0
    %219 = vmatpush1.msra.mxu0 0.0
    %220 = vmatprep.subr.mxu0 0.0
    %221 = vmatpush1.msra.mxu0 0.0
    %222 = vmatprep.subr.mxu0 0.0
    %223 = vmatpush1.msra.mxu0 0.0
    %224 = vmatprep.subr.mxu0 0.0
    %225 = vmatpush1.msra.mxu0 0.0
    %226 = vmatprep.subr.mxu0 0.0
    %227 = vmatpush1.msra.mxu0 0.0
    %228 = vmatprep.subr.mxu0 0.0
    %229 = vmatpush1.msra.mxu0 0.0
    %230 = vmatprep.subr.mxu0 0.0
    %231 = vmatpush1.msra.mxu0 0.0
    %232 = vmatprep.subr.mxu0 0.0
    %233 = vmatpush1.msra.mxu0 0.0
    %234 = vmatprep.subr.mxu0 0.0
    %235 = vmatpush1.msra.mxu0 0.0
    %236 = vmatprep.subr.mxu0 0.0
    %237 = vmatpush1.msra.mxu0 0.0
    %238 = vmatprep.subr.mxu0 0.0
    %239 = vmatpush1.msra.mxu0 0.0
    %240 = vmatprep.subr.mxu0 0.0
    %241 = vmatpush1.msra.mxu0 0.0
    %242 = vmatprep.subr.mxu0 0.0
    %243 = vmatpush1.msra.mxu0 0.0
    %244 = vmatprep.subr.mxu0 0.0
    %245 = vmatpush1.msra.mxu0 0.0
    %246 = vmatprep.subr.mxu0 0.0
    %247 = vmatpush1.msra.mxu0 0.0
    %248 = vmatprep.mubr.f32.mxu0 0.0
    %v249 = vand.u32 %v101, 4294901760
    %250 = vmatmul.mubr.f32.gmra.mrb[0].mxu0 %v249
    %v251 = vpop.f32.mrb[0].mxu0
    %v252 = vadd.f32 %v176, %v251
    %v253 = vpop.f32.mrb[0].mxu0
    %254 = vdwg.mxu0
    %255 = vmatprep.subr.mxu0 0.0
    %v256 = vand.u32 %v92, 4294901760
    %v257 = vsub.f32 %v92, %v256
    %258 = vmatpush1.msra.mxu0 %v257
    %259 = vmatprep.subr.mxu0 0.0
    %260 = vmatpush1.msra.mxu0 0.0
    %261 = vmatprep.subr.mxu0 0.0
    %262 = vmatpush1.msra.mxu0 0.0
    %263 = vmatprep.subr.mxu0 0.0
    %264 = vmatpush1.msra.mxu0 0.0
    %265 = vmatprep.subr.mxu0 0.0
    %266 = vmatpush1.msra.mxu0 0.0
    %267 = vmatprep.subr.mxu0 0.0
    %268 = vmatpush1.msra.mxu0 0.0
    %269 = vmatprep.subr.mxu0 0.0
    %270 = vmatpush1.msra.mxu0 0.0
    %271 = vmatprep.subr.mxu0 0.0
    %272 = vmatpush1.msra.mxu0 0.0
    %273 = vmatprep.subr.mxu0 0.0
    %274 = vmatpush1.msra.mxu0 0.0
    %275 = vmatprep.subr.mxu0 0.0
    %276 = vmatpush1.msra.mxu0 0.0
    %277 = vmatprep.subr.mxu0 0.0
    %278 = vmatpush1.msra.mxu0 0.0
    %279 = vmatprep.subr.mxu0 0.0
    %280 = vmatpush1.msra.mxu0 0.0
    %281 = vmatprep.subr.mxu0 0.0
    %282 = vmatpush1.msra.mxu0 0.0
    %283 = vmatprep.subr.mxu0 0.0
    %284 = vmatpush1.msra.mxu0 0.0
    %285 = vmatprep.subr.mxu0 0.0
    %286 = vmatpush1.msra.mxu0 0.0
    %287 = vmatprep.subr.mxu0 0.0
    %288 = vmatpush1.msra.mxu0 0.0
    %289 = vmatprep.subr.mxu0 0.0
    %290 = vmatpush1.msra.mxu0 0.0
    %291 = vmatprep.subr.mxu0 0.0
    %292 = vmatpush1.msra.mxu0 0.0
    %293 = vmatprep.subr.mxu0 0.0
    %294 = vmatpush1.msra.mxu0 0.0
    %295 = vmatprep.subr.mxu0 0.0
    %296 = vmatpush1.msra.mxu0 0.0
    %297 = vmatprep.subr.mxu0 0.0
    %298 = vmatpush1.msra.mxu0 0.0
    %299 = vmatprep.subr.mxu0 0.0
    %300 = vmatpush1.msra.mxu0 0.0
    %301 = vmatprep.subr.mxu0 0.0
    %302 = vmatpush1.msra.mxu0 0.0
    %303 = vmatprep.subr.mxu0 0.0
    %304 = vmatpush1.msra.mxu0 0.0
    %305 = vmatprep.subr.mxu0 0.0
    %306 = vmatpush1.msra.mxu0 0.0
    %307 = vmatprep.subr.mxu0 0.0
    %308 = vmatpush1.msra.mxu0 0.0
    %309 = vmatprep.subr.mxu0 0.0
    %310 = vmatpush1.msra.mxu0 0.0
    %311 = vmatprep.subr.mxu0 0.0
    %312 = vmatpush1.msra.mxu0 0.0
    %313 = vmatprep.subr.mxu0 0.0
    %314 = vmatpush1.msra.mxu0 0.0
    %315 = vmatprep.subr.mxu0 0.0
    %316 = vmatpush1.msra.mxu0 0.0
    %317 = vmatprep.subr.mxu0 0.0
    %318 = vmatpush1.msra.mxu0 0.0
    %319 = vmatprep.subr.mxu0 0.0
    %320 = vmatpush1.msra.mxu0 0.0
    %321 = vmatprep.mubr.f32.mxu0 0.0
    %v322 = vand.u32 %v101, 4294901760
    %v323 = vsub.f32 %v101, %v322
    %324 = vmatmul.mubr.f32.gmra.mrb[0].mxu0 %v323
    %v325 = vpop.f32.mrb[0].mxu0
    %v326 = vadd.f32 %v252, %v325
    %v327 = vpop.f32.mrb[0].mxu0
    %328 = vdwg.mxu0
    %329 = vmatprep.subr.mxu0 0.0
    %v330 = vand.u32 %v92, 4294901760
    %331 = vmatpush1.msra.mxu0 %v330
    %332 = vmatprep.subr.mxu0 0.0
    %333 = vmatpush1.msra.mxu0 0.0
    %334 = vmatprep.subr.mxu0 0.0
    %335 = vmatpush1.msra.mxu0 0.0
    %336 = vmatprep.subr.mxu0 0.0
    %337 = vmatpush1.msra.mxu0 0.0
    %338 = vmatprep.subr.mxu0 0.0
    %339 = vmatpush1.msra.mxu0 0.0
    %340 = vmatprep.subr.mxu0 0.0
    %341 = vmatpush1.msra.mxu0 0.0
    %342 = vmatprep.subr.mxu0 0.0
    %343 = vmatpush1.msra.mxu0 0.0
    %344 = vmatprep.subr.mxu0 0.0
    %345 = vmatpush1.msra.mxu0 0.0
    %346 = vmatprep.subr.mxu0 0.0
    %347 = vmatpush1.msra.mxu0 0.0
    %348 = vmatprep.subr.mxu0 0.0
    %349 = vmatpush1.msra.mxu0 0.0
    %350 = vmatprep.subr.mxu0 0.0
    %351 = vmatpush1.msra.mxu0 0.0
    %352 = vmatprep.subr.mxu0 0.0
    %353 = vmatpush1.msra.mxu0 0.0
    %354 = vmatprep.subr.mxu0 0.0
    %355 = vmatpush1.msra.mxu0 0.0
    %356 = vmatprep.subr.mxu0 0.0
    %357 = vmatpush1.msra.mxu0 0.0
    %358 = vmatprep.subr.mxu0 0.0
    %359 = vmatpush1.msra.mxu0 0.0
    %360 = vmatprep.subr.mxu0 0.0
    %361 = vmatpush1.msra.mxu0 0.0
    %362 = vmatprep.subr.mxu0 0.0
    %363 = vmatpush1.msra.mxu0 0.0
    %364 = vmatprep.subr.mxu0 0.0
    %365 = vmatpush1.msra.mxu0 0.0
    %366 = vmatprep.subr.mxu0 0.0
    %367 = vmatpush1.msra.mxu0 0.0
    %368 = vmatprep.subr.mxu0 0.0
    %369 = vmatpush1.msra.mxu0 0.0
    %370 = vmatprep.subr.mxu0 0.0
    %371 = vmatpush1.msra.mxu0 0.0
    %372 = vmatprep.subr.mxu0 0.0
    %373 = vmatpush1.msra.mxu0 0.0
    %374 = vmatprep.subr.mxu0 0.0
    %375 = vmatpush1.msra.mxu0 0.0
    %376 = vmatprep.subr.mxu0 0.0
    %377 = vmatpush1.msra.mxu0 0.0
    %378 = vmatprep.subr.mxu0 0.0
    %379 = vmatpush1.msra.mxu0 0.0
    %380 = vmatprep.subr.mxu0 0.0
    %381 = vmatpush1.msra.mxu0 0.0
    %382 = vmatprep.subr.mxu0 0.0
    %383 = vmatpush1.msra.mxu0 0.0
    %384 = vmatprep.subr.mxu0 0.0
    %385 = vmatpush1.msra.mxu0 0.0
    %386 = vmatprep.subr.mxu0 0.0
    %387 = vmatpush1.msra.mxu0 0.0
    %388 = vmatprep.subr.mxu0 0.0
    %389 = vmatpush1.msra.mxu0 0.0
    %390 = vmatprep.subr.mxu0 0.0
    %391 = vmatpush1.msra.mxu0 0.0
    %392 = vmatprep.subr.mxu0 0.0
    %393 = vmatpush1.msra.mxu0 0.0
    %394 = vmatprep.mubr.f32.mxu0 0.0
    %v395 = vand.u32 %v101, 4294901760
    %v396 = vsub.f32 %v101, %v395
    %v397 = vand.u32 %v396, 4294901760
    %398 = vmatmul.mubr.f32.gmra.mrb[0].mxu0 %v397
    %v399 = vpop.f32.mrb[0].mxu0
    %v400 = vadd.f32 %v326, %v399
    %v401 = vpop.f32.mrb[0].mxu0
    %402 = vdwg.mxu0
    %403 = vmatprep.subr.mxu0 0.0
    %v404 = vand.u32 %v92, 4294901760
    %v405 = vsub.f32 %v92, %v404
    %v406 = vand.u32 %v405, 4294901760
    %407 = vmatpush1.msra.mxu0 %v406
    %408 = vmatprep.subr.mxu0 0.0
    %409 = vmatpush1.msra.mxu0 0.0
    %410 = vmatprep.subr.mxu0 0.0
    %411 = vmatpush1.msra.mxu0 0.0
    %412 = vmatprep.subr.mxu0 0.0
    %413 = vmatpush1.msra.mxu0 0.0
    %414 = vmatprep.subr.mxu0 0.0
    %415 = vmatpush1.msra.mxu0 0.0
    %416 = vmatprep.subr.mxu0 0.0
    %417 = vmatpush1.msra.mxu0 0.0
    %418 = vmatprep.subr.mxu0 0.0
    %419 = vmatpush1.msra.mxu0 0.0
    %420 = vmatprep.subr.mxu0 0.0
    %421 = vmatpush1.msra.mxu0 0.0
    %422 = vmatprep.subr.mxu0 0.0
    %423 = vmatpush1.msra.mxu0 0.0
    %424 = vmatprep.subr.mxu0 0.0
    %425 = vmatpush1.msra.mxu0 0.0
    %426 = vmatprep.subr.mxu0 0.0
    %427 = vmatpush1.msra.mxu0 0.0
    %428 = vmatprep.subr.mxu0 0.0
    %429 = vmatpush1.msra.mxu0 0.0
    %430 = vmatprep.subr.mxu0 0.0
    %431 = vmatpush1.msra.mxu0 0.0
    %432 = vmatprep.subr.mxu0 0.0
    %433 = vmatpush1.msra.mxu0 0.0
    %434 = vmatprep.subr.mxu0 0.0
    %435 = vmatpush1.msra.mxu0 0.0
    %436 = vmatprep.subr.mxu0 0.0
    %437 = vmatpush1.msra.mxu0 0.0
    %438 = vmatprep.subr.mxu0 0.0
    %439 = vmatpush1.msra.mxu0 0.0
    %440 = vmatprep.subr.mxu0 0.0
    %441 = vmatpush1.msra.mxu0 0.0
    %442 = vmatprep.subr.mxu0 0.0
    %443 = vmatpush1.msra.mxu0 0.0
    %444 = vmatprep.subr.mxu0 0.0
    %445 = vmatpush1.msra.mxu0 0.0
    %446 = vmatprep.subr.mxu0 0.0
    %447 = vmatpush1.msra.mxu0 0.0
    %448 = vmatprep.subr.mxu0 0.0
    %449 = vmatpush1.msra.mxu0 0.0
    %450 = vmatprep.subr.mxu0 0.0
    %451 = vmatpush1.msra.mxu0 0.0
    %452 = vmatprep.subr.mxu0 0.0
    %453 = vmatpush1.msra.mxu0 0.0
    %454 = vmatprep.subr.mxu0 0.0
    %455 = vmatpush1.msra.mxu0 0.0
    %456 = vmatprep.subr.mxu0 0.0
    %457 = vmatpush1.msra.mxu0 0.0
    %458 = vmatprep.subr.mxu0 0.0
    %459 = vmatpush1.msra.mxu0 0.0
    %460 = vmatprep.subr.mxu0 0.0
    %461 = vmatpush1.msra.mxu0 0.0
    %462 = vmatprep.subr.mxu0 0.0
    %463 = vmatpush1.msra.mxu0 0.0
    %464 = vmatprep.subr.mxu0 0.0
    %465 = vmatpush1.msra.mxu0 0.0
    %466 = vmatprep.subr.mxu0 0.0
    %467 = vmatpush1.msra.mxu0 0.0
    %468 = vmatprep.subr.mxu0 0.0
    %469 = vmatpush1.msra.mxu0 0.0
    %470 = vmatprep.mubr.f32.mxu0 0.0
    %v471 = vand.u32 %v101, 4294901760
    %472 = vmatmul.mubr.f32.gmra.mrb[0].mxu0 %v471
    %v473 = vpop.f32.mrb[0].mxu0
    %v474 = vadd.f32 %v400, %v473
    %v475 = vpop.f32.mrb[0].mxu0
    %476 = vdwg.mxu0
    %477 = vmatprep.subr.mxu0 0.0
    %v478 = vand.u32 %v92, 4294901760
    %479 = vmatpush1.msra.mxu0 %v478
    %480 = vmatprep.subr.mxu0 0.0
    %481 = vmatpush1.msra.mxu0 0.0
    %482 = vmatprep.subr.mxu0 0.0
    %483 = vmatpush1.msra.mxu0 0.0
    %484 = vmatprep.subr.mxu0 0.0
    %485 = vmatpush1.msra.mxu0 0.0
    %486 = vmatprep.subr.mxu0 0.0
    %487 = vmatpush1.msra.mxu0 0.0
    %488 = vmatprep.subr.mxu0 0.0
    %489 = vmatpush1.msra.mxu0 0.0
    %490 = vmatprep.subr.mxu0 0.0
    %491 = vmatpush1.msra.mxu0 0.0
    %492 = vmatprep.subr.mxu0 0.0
    %493 = vmatpush1.msra.mxu0 0.0
    %494 = vmatprep.subr.mxu0 0.0
    %495 = vmatpush1.msra.mxu0 0.0
    %496 = vmatprep.subr.mxu0 0.0
    %497 = vmatpush1.msra.mxu0 0.0
    %498 = vmatprep.subr.mxu0 0.0
    %499 = vmatpush1.msra.mxu0 0.0
    %500 = vmatprep.subr.mxu0 0.0
    %501 = vmatpush1.msra.mxu0 0.0
    %502 = vmatprep.subr.mxu0 0.0
    %503 = vmatpush1.msra.mxu0 0.0
    %504 = vmatprep.subr.mxu0 0.0
    %505 = vmatpush1.msra.mxu0 0.0
    %506 = vmatprep.subr.mxu0 0.0
    %507 = vmatpush1.msra.mxu0 0.0
    %508 = vmatprep.subr.mxu0 0.0
    %509 = vmatpush1.msra.mxu0 0.0
    %510 = vmatprep.subr.mxu0 0.0
    %511 = vmatpush1.msra.mxu0 0.0
    %512 = vmatprep.subr.mxu0 0.0
    %513 = vmatpush1.msra.mxu0 0.0
    %514 = vmatprep.subr.mxu0 0.0
    %515 = vmatpush1.msra.mxu0 0.0
    %516 = vmatprep.subr.mxu0 0.0
    %517 = vmatpush1.msra.mxu0 0.0
    %518 = vmatprep.subr.mxu0 0.0
    %519 = vmatpush1.msra.mxu0 0.0
    %520 = vmatprep.subr.mxu0 0.0
    %521 = vmatpush1.msra.mxu0 0.0
    %522 = vmatprep.subr.mxu0 0.0
    %523 = vmatpush1.msra.mxu0 0.0
    %524 = vmatprep.subr.mxu0 0.0
    %525 = vmatpush1.msra.mxu0 0.0
    %526 = vmatprep.subr.mxu0 0.0
    %527 = vmatpush1.msra.mxu0 0.0
    %528 = vmatprep.subr.mxu0 0.0
    %529 = vmatpush1.msra.mxu0 0.0
    %530 = vmatprep.subr.mxu0 0.0
    %531 = vmatpush1.msra.mxu0 0.0
    %532 = vmatprep.subr.mxu0 0.0
    %533 = vmatpush1.msra.mxu0 0.0
    %534 = vmatprep.subr.mxu0 0.0
    %535 = vmatpush1.msra.mxu0 0.0
    %536 = vmatprep.subr.mxu0 0.0
    %537 = vmatpush1.msra.mxu0 0.0
    %538 = vmatprep.subr.mxu0 0.0
    %539 = vmatpush1.msra.mxu0 0.0
    %540 = vmatprep.subr.mxu0 0.0
    %541 = vmatpush1.msra.mxu0 0.0
    %542 = vmatprep.mubr.f32.mxu0 0.0
    %v543 = vand.u32 %v101, 4294901760
    %544 = vmatmul.mubr.f32.gmra.mrb[0].mxu0 %v543
    %v545 = vpop.f32.mrb[0].mxu0
    %v546 = vadd.f32 %v474, %v545
    %v547 = vpop.f32.mrb[0].mxu0
    %548 = vdwg.mxu0
    %549 = vmatprep.subr.mxu0 0.0
    %v550 = vand.u32 %v98, 4294901760
    %551 = vmatpush1.msra.mxu0 %v550
    %552 = vmatprep.subr.mxu0 0.0
    %553 = vmatpush1.msra.mxu0 0.0
    %554 = vmatprep.subr.mxu0 0.0
    %555 = vmatpush1.msra.mxu0 0.0
    %556 = vmatprep.subr.mxu0 0.0
    %557 = vmatpush1.msra.mxu0 0.0
    %558 = vmatprep.subr.mxu0 0.0
    %559 = vmatpush1.msra.mxu0 0.0
    %560 = vmatprep.subr.mxu0 0.0
    %561 = vmatpush1.msra.mxu0 0.0
    %562 = vmatprep.subr.mxu0 0.0
    %563 = vmatpush1.msra.mxu0 0.0
    %564 = vmatprep.subr.mxu0 0.0
    %565 = vmatpush1.msra.mxu0 0.0
    %566 = vmatprep.subr.mxu0 0.0
    %567 = vmatpush1.msra.mxu0 0.0
    %568 = vmatprep.subr.mxu0 0.0
    %569 = vmatpush1.msra.mxu0 0.0
    %570 = vmatprep.subr.mxu0 0.0
    %571 = vmatpush1.msra.mxu0 0.0
    %572 = vmatprep.subr.mxu0 0.0
    %573 = vmatpush1.msra.mxu0 0.0
    %574 = vmatprep.subr.mxu0 0.0
    %575 = vmatpush1.msra.mxu0 0.0
    %576 = vmatprep.subr.mxu0 0.0
    %577 = vmatpush1.msra.mxu0 0.0
    %578 = vmatprep.subr.mxu0 0.0
    %579 = vmatpush1.msra.mxu0 0.0
    %580 = vmatprep.subr.mxu0 0.0
    %581 = vmatpush1.msra.mxu0 0.0
    %582 = vmatprep.subr.mxu0 0.0
    %583 = vmatpush1.msra.mxu0 0.0
    %584 = vmatprep.subr.mxu0 0.0
    %585 = vmatpush1.msra.mxu0 0.0
    %586 = vmatprep.subr.mxu0 0.0
    %587 = vmatpush1.msra.mxu0 0.0
    %588 = vmatprep.subr.mxu0 0.0
    %589 = vmatpush1.msra.mxu0 0.0
    %590 = vmatprep.subr.mxu0 0.0
    %591 = vmatpush1.msra.mxu0 0.0
    %592 = vmatprep.subr.mxu0 0.0
    %593 = vmatpush1.msra.mxu0 0.0
    %594 = vmatprep.subr.mxu0 0.0
    %595 = vmatpush1.msra.mxu0 0.0
    %596 = vmatprep.subr.mxu0 0.0
    %597 = vmatpush1.msra.mxu0 0.0
    %598 = vmatprep.subr.mxu0 0.0
    %599 = vmatpush1.msra.mxu0 0.0
    %600 = vmatprep.subr.mxu0 0.0
    %601 = vmatpush1.msra.mxu0 0.0
    %602 = vmatprep.subr.mxu0 0.0
    %603 = vmatpush1.msra.mxu0 0.0
    %604 = vmatprep.subr.mxu0 0.0
    %605 = vmatpush1.msra.mxu0 0.0
    %606 = vmatprep.subr.mxu0 0.0
    %607 = vmatpush1.msra.mxu0 0.0
    %608 = vmatprep.subr.mxu0 0.0
    %609 = vmatpush1.msra.mxu0 0.0
    %610 = vmatprep.subr.mxu0 0.0
    %611 = vmatpush1.msra.mxu0 0.0
    %612 = vmatprep.subr.mxu0 0.0
    %613 = vmatpush1.msra.mxu0 0.0
    %614 = vmatprep.mubr.f32.mxu0 0.0
    %v615 = vand.u32 %v101, 4294901760
    %v616 = vsub.f32 %v101, %v615
    %v617 = vand.u32 %v616, 4294901760
    %v618 = vsub.f32 %v616, %v617
    %v619 = vand.u32 %v618, 4294901760
    %620 = vmatmul.mubr.f32.gmra.mrb[0].mxu0 %v619
    %v621 = vpop.f32.mrb[0].mxu0
    %v622 = vadd.f32 0.0, %v621
    %v623 = vpop.f32.mrb[0].mxu0
    %624 = vdwg.mxu0
    %625 = vmatprep.subr.mxu0 0.0
    %v626 = vand.u32 %v98, 4294901760
    %v627 = vsub.f32 %v98, %v626
    %v628 = vand.u32 %v627, 4294901760
    %v629 = vsub.f32 %v627, %v628
    %v630 = vand.u32 %v629, 4294901760
    %631 = vmatpush1.msra.mxu0 %v630
    %632 = vmatprep.subr.mxu0 0.0
    %633 = vmatpush1.msra.mxu0 0.0
    %634 = vmatprep.subr.mxu0 0.0
    %635 = vmatpush1.msra.mxu0 0.0
    %636 = vmatprep.subr.mxu0 0.0
    %637 = vmatpush1.msra.mxu0 0.0
    %638 = vmatprep.subr.mxu0 0.0
    %639 = vmatpush1.msra.mxu0 0.0
    %640 = vmatprep.subr.mxu0 0.0
    %641 = vmatpush1.msra.mxu0 0.0
    %642 = vmatprep.subr.mxu0 0.0
    %643 = vmatpush1.msra.mxu0 0.0
    %644 = vmatprep.subr.mxu0 0.0
    %645 = vmatpush1.msra.mxu0 0.0
    %646 = vmatprep.subr.mxu0 0.0
    %647 = vmatpush1.msra.mxu0 0.0
    %648 = vmatprep.subr.mxu0 0.0
    %649 = vmatpush1.msra.mxu0 0.0
    %650 = vmatprep.subr.mxu0 0.0
    %651 = vmatpush1.msra.mxu0 0.0
    %652 = vmatprep.subr.mxu0 0.0
    %653 = vmatpush1.msra.mxu0 0.0
    %654 = vmatprep.subr.mxu0 0.0
    %655 = vmatpush1.msra.mxu0 0.0
    %656 = vmatprep.subr.mxu0 0.0
    %657 = vmatpush1.msra.mxu0 0.0
    %658 = vmatprep.subr.mxu0 0.0
    %659 = vmatpush1.msra.mxu0 0.0
    %660 = vmatprep.subr.mxu0 0.0
    %661 = vmatpush1.msra.mxu0 0.0
    %662 = vmatprep.subr.mxu0 0.0
    %663 = vmatpush1.msra.mxu0 0.0
    %664 = vmatprep.subr.mxu0 0.0
    %665 = vmatpush1.msra.mxu0 0.0
    %666 = vmatprep.subr.mxu0 0.0
    %667 = vmatpush1.msra.mxu0 0.0
    %668 = vmatprep.subr.mxu0 0.0
    %669 = vmatpush1.msra.mxu0 0.0
    %670 = vmatprep.subr.mxu0 0.0
    %671 = vmatpush1.msra.mxu0 0.0
    %672 = vmatprep.subr.mxu0 0.0
    %673 = vmatpush1.msra.mxu0 0.0
    %674 = vmatprep.subr.mxu0 0.0
    %675 = vmatpush1.msra.mxu0 0.0
    %676 = vmatprep.subr.mxu0 0.0
    %677 = vmatpush1.msra.mxu0 0.0
    %678 = vmatprep.subr.mxu0 0.0
    %679 = vmatpush1.msra.mxu0 0.0
    %680 = vmatprep.subr.mxu0 0.0
    %681 = vmatpush1.msra.mxu0 0.0
    %682 = vmatprep.subr.mxu0 0.0
    %683 = vmatpush1.msra.mxu0 0.0
    %684 = vmatprep.subr.mxu0 0.0
    %685 = vmatpush1.msra.mxu0 0.0
    %686 = vmatprep.subr.mxu0 0.0
    %687 = vmatpush1.msra.mxu0 0.0
    %688 = vmatprep.subr.mxu0 0.0
    %689 = vmatpush1.msra.mxu0 0.0
    %690 = vmatprep.subr.mxu0 0.0
    %691 = vmatpush1.msra.mxu0 0.0
    %692 = vmatprep.subr.mxu0 0.0
    %693 = vmatpush1.msra.mxu0 0.0
    %694 = vmatprep.mubr.f32.mxu0 0.0
    %v695 = vand.u32 %v101, 4294901760
    %696 = vmatmul.mubr.f32.gmra.mrb[0].mxu0 %v695
    %v697 = vpop.f32.mrb[0].mxu0
    %v698 = vadd.f32 %v622, %v697
    %v699 = vpop.f32.mrb[0].mxu0
    %700 = vdwg.mxu0
    %701 = vmatprep.subr.mxu0 0.0
    %v702 = vand.u32 %v98, 4294901760
    %v703 = vsub.f32 %v98, %v702
    %704 = vmatpush1.msra.mxu0 %v703
    %705 = vmatprep.subr.mxu0 0.0
    %706 = vmatpush1.msra.mxu0 0.0
    %707 = vmatprep.subr.mxu0 0.0
    %708 = vmatpush1.msra.mxu0 0.0
    %709 = vmatprep.subr.mxu0 0.0
    %710 = vmatpush1.msra.mxu0 0.0
    %711 = vmatprep.subr.mxu0 0.0
    %712 = vmatpush1.msra.mxu0 0.0
    %713 = vmatprep.subr.mxu0 0.0
    %714 = vmatpush1.msra.mxu0 0.0
    %715 = vmatprep.subr.mxu0 0.0
    %716 = vmatpush1.msra.mxu0 0.0
    %717 = vmatprep.subr.mxu0 0.0
    %718 = vmatpush1.msra.mxu0 0.0
    %719 = vmatprep.subr.mxu0 0.0
    %720 = vmatpush1.msra.mxu0 0.0
    %721 = vmatprep.subr.mxu0 0.0
    %722 = vmatpush1.msra.mxu0 0.0
    %723 = vmatprep.subr.mxu0 0.0
    %724 = vmatpush1.msra.mxu0 0.0
    %725 = vmatprep.subr.mxu0 0.0
    %726 = vmatpush1.msra.mxu0 0.0
    %727 = vmatprep.subr.mxu0 0.0
    %728 = vmatpush1.msra.mxu0 0.0
    %729 = vmatprep.subr.mxu0 0.0
    %730 = vmatpush1.msra.mxu0 0.0
    %731 = vmatprep.subr.mxu0 0.0
    %732 = vmatpush1.msra.mxu0 0.0
    %733 = vmatprep.subr.mxu0 0.0
    %734 = vmatpush1.msra.mxu0 0.0
    %735 = vmatprep.subr.mxu0 0.0
    %736 = vmatpush1.msra.mxu0 0.0
    %737 = vmatprep.subr.mxu0 0.0
    %738 = vmatpush1.msra.mxu0 0.0
    %739 = vmatprep.subr.mxu0 0.0
    %740 = vmatpush1.msra.mxu0 0.0
    %741 = vmatprep.subr.mxu0 0.0
    %742 = vmatpush1.msra.mxu0 0.0
    %743 = vmatprep.subr.mxu0 0.0
    %744 = vmatpush1.msra.mxu0 0.0
    %745 = vmatprep.subr.mxu0 0.0
    %746 = vmatpush1.msra.mxu0 0.0
    %747 = vmatprep.subr.mxu0 0.0
    %748 = vmatpush1.msra.mxu0 0.0
    %749 = vmatprep.subr.mxu0 0.0
    %750 = vmatpush1.msra.mxu0 0.0
    %751 = vmatprep.subr.mxu0 0.0
    %752 = vmatpush1.msra.mxu0 0.0
    %753 = vmatprep.subr.mxu0 0.0
    %754 = vmatpush1.msra.mxu0 0.0
    %755 = vmatprep.subr.mxu0 0.0
    %756 = vmatpush1.msra.mxu0 0.0
    %757 = vmatprep.subr.mxu0 0.0
    %758 = vmatpush1.msra.mxu0 0.0
    %759 = vmatprep.subr.mxu0 0.0
    %760 = vmatpush1.msra.mxu0 0.0
    %761 = vmatprep.subr.mxu0 0.0
    %762 = vmatpush1.msra.mxu0 0.0
    %763 = vmatprep.subr.mxu0 0.0
    %764 = vmatpush1.msra.mxu0 0.0
    %765 = vmatprep.subr.mxu0 0.0
    %766 = vmatpush1.msra.mxu0 0.0
    %767 = vmatprep.mubr.f32.mxu0 0.0
    %v768 = vand.u32 %v101, 4294901760
    %v769 = vsub.f32 %v101, %v768
    %770 = vmatmul.mubr.f32.gmra.mrb[0].mxu0 %v769
    %v771 = vpop.f32.mrb[0].mxu0
    %v772 = vadd.f32 %v698, %v771
    %v773 = vpop.f32.mrb[0].mxu0
    %774 = vdwg.mxu0
    %775 = vmatprep.subr.mxu0 0.0
    %v776 = vand.u32 %v98, 4294901760
    %777 = vmatpush1.msra.mxu0 %v776
    %778 = vmatprep.subr.mxu0 0.0
    %779 = vmatpush1.msra.mxu0 0.0
    %780 = vmatprep.subr.mxu0 0.0
    %781 = vmatpush1.msra.mxu0 0.0
    %782 = vmatprep.subr.mxu0 0.0
    %783 = vmatpush1.msra.mxu0 0.0
    %784 = vmatprep.subr.mxu0 0.0
    %785 = vmatpush1.msra.mxu0 0.0
    %786 = vmatprep.subr.mxu0 0.0
    %787 = vmatpush1.msra.mxu0 0.0
    %788 = vmatprep.subr.mxu0 0.0
    %789 = vmatpush1.msra.mxu0 0.0
    %790 = vmatprep.subr.mxu0 0.0
    %791 = vmatpush1.msra.mxu0 0.0
    %792 = vmatprep.subr.mxu0 0.0
    %793 = vmatpush1.msra.mxu0 0.0
    %794 = vmatprep.subr.mxu0 0.0
    %795 = vmatpush1.msra.mxu0 0.0
    %796 = vmatprep.subr.mxu0 0.0
    %797 = vmatpush1.msra.mxu0 0.0
    %798 = vmatprep.subr.mxu0 0.0
    %799 = vmatpush1.msra.mxu0 0.0
    %800 = vmatprep.subr.mxu0 0.0
    %801 = vmatpush1.msra.mxu0 0.0
    %802 = vmatprep.subr.mxu0 0.0
    %803 = vmatpush1.msra.mxu0 0.0
    %804 = vmatprep.subr.mxu0 0.0
    %805 = vmatpush1.msra.mxu0 0.0
    %806 = vmatprep.subr.mxu0 0.0
    %807 = vmatpush1.msra.mxu0 0.0
    %808 = vmatprep.subr.mxu0 0.0
    %809 = vmatpush1.msra.mxu0 0.0
    %810 = vmatprep.subr.mxu0 0.0
    %811 = vmatpush1.msra.mxu0 0.0
    %812 = vmatprep.subr.mxu0 0.0
    %813 = vmatpush1.msra.mxu0 0.0
    %814 = vmatprep.subr.mxu0 0.0
    %815 = vmatpush1.msra.mxu0 0.0
    %816 = vmatprep.subr.mxu0 0.0
    %817 = vmatpush1.msra.mxu0 0.0
    %818 = vmatprep.subr.mxu0 0.0
    %819 = vmatpush1.msra.mxu0 0.0
    %820 = vmatprep.subr.mxu0 0.0
    %821 = vmatpush1.msra.mxu0 0.0
    %822 = vmatprep.subr.mxu0 0.0
    %823 = vmatpush1.msra.mxu0 0.0
    %824 = vmatprep.subr.mxu0 0.0
    %825 = vmatpush1.msra.mxu0 0.0
    %826 = vmatprep.subr.mxu0 0.0
    %827 = vmatpush1.msra.mxu0 0.0
    %828 = vmatprep.subr.mxu0 0.0
    %829 = vmatpush1.msra.mxu0 0.0
    %830 = vmatprep.subr.mxu0 0.0
    %831 = vmatpush1.msra.mxu0 0.0
    %832 = vmatprep.subr.mxu0 0.0
    %833 = vmatpush1.msra.mxu0 0.0
    %834 = vmatprep.subr.mxu0 0.0
    %835 = vmatpush1.msra.mxu0 0.0
    %836 = vmatprep.subr.mxu0 0.0
    %837 = vmatpush1.msra.mxu0 0.0
    %838 = vmatprep.subr.mxu0 0.0
    %839 = vmatpush1.msra.mxu0 0.0
    %840 = vmatprep.mubr.f32.mxu0 0.0
    %v841 = vand.u32 %v101, 4294901760
    %v842 = vsub.f32 %v101, %v841
    %v843 = vand.u32 %v842, 4294901760
    %844 = vmatmul.mubr.f32.gmra.mrb[0].mxu0 %v843
    %v845 = vpop.f32.mrb[0].mxu0
    %v846 = vadd.f32 %v772, %v845
    %v847 = vpop.f32.mrb[0].mxu0
    %848 = vdwg.mxu0
    %849 = vmatprep.subr.mxu0 0.0
    %v850 = vand.u32 %v98, 4294901760
    %v851 = vsub.f32 %v98, %v850
    %v852 = vand.u32 %v851, 4294901760
    %853 = vmatpush1.msra.mxu0 %v852
    %854 = vmatprep.subr.mxu0 0.0
    %855 = vmatpush1.msra.mxu0 0.0
    %856 = vmatprep.subr.mxu0 0.0
    %857 = vmatpush1.msra.mxu0 0.0
    %858 = vmatprep.subr.mxu0 0.0
    %859 = vmatpush1.msra.mxu0 0.0
    %860 = vmatprep.subr.mxu0 0.0
    %861 = vmatpush1.msra.mxu0 0.0
    %862 = vmatprep.subr.mxu0 0.0
    %863 = vmatpush1.msra.mxu0 0.0
    %864 = vmatprep.subr.mxu0 0.0
    %865 = vmatpush1.msra.mxu0 0.0
    %866 = vmatprep.subr.mxu0 0.0
    %867 = vmatpush1.msra.mxu0 0.0
    %868 = vmatprep.subr.mxu0 0.0
    %869 = vmatpush1.msra.mxu0 0.0
    %870 = vmatprep.subr.mxu0 0.0
    %871 = vmatpush1.msra.mxu0 0.0
    %872 = vmatprep.subr.mxu0 0.0
    %873 = vmatpush1.msra.mxu0 0.0
    %874 = vmatprep.subr.mxu0 0.0
    %875 = vmatpush1.msra.mxu0 0.0
    %876 = vmatprep.subr.mxu0 0.0
    %877 = vmatpush1.msra.mxu0 0.0
    %878 = vmatprep.subr.mxu0 0.0
    %879 = vmatpush1.msra.mxu0 0.0
    %880 = vmatprep.subr.mxu0 0.0
    %881 = vmatpush1.msra.mxu0 0.0
    %882 = vmatprep.subr.mxu0 0.0
    %883 = vmatpush1.msra.mxu0 0.0
    %884 = vmatprep.subr.mxu0 0.0
    %885 = vmatpush1.msra.mxu0 0.0
    %886 = vmatprep.subr.mxu0 0.0
    %887 = vmatpush1.msra.mxu0 0.0
    %888 = vmatprep.subr.mxu0 0.0
    %889 = vmatpush1.msra.mxu0 0.0
    %890 = vmatprep.subr.mxu0 0.0
    %891 = vmatpush1.msra.mxu0 0.0
    %892 = vmatprep.subr.mxu0 0.0
    %893 = vmatpush1.msra.mxu0 0.0
    %894 = vmatprep.subr.mxu0 0.0
    %895 = vmatpush1.msra.mxu0 0.0
    %896 = vmatprep.subr.mxu0 0.0
    %897 = vmatpush1.msra.mxu0 0.0
    %898 = vmatprep.subr.mxu0 0.0
    %899 = vmatpush1.msra.mxu0 0.0
    %900 = vmatprep.subr.mxu0 0.0
    %901 = vmatpush1.msra.mxu0 0.0
    %902 = vmatprep.subr.mxu0 0.0
    %903 = vmatpush1.msra.mxu0 0.0
    %904 = vmatprep.subr.mxu0 0.0
    %905 = vmatpush1.msra.mxu0 0.0
    %906 = vmatprep.subr.mxu0 0.0
    %907 = vmatpush1.msra.mxu0 0.0
    %908 = vmatprep.subr.mxu0 0.0
    %909 = vmatpush1.msra.mxu0 0.0
    %910 = vmatprep.subr.mxu0 0.0
    %911 = vmatpush1.msra.mxu0 0.0
    %912 = vmatprep.subr.mxu0 0.0
    %913 = vmatpush1.msra.mxu0 0.0
    %914 = vmatprep.subr.mxu0 0.0
    %915 = vmatpush1.msra.mxu0 0.0
    %916 = vmatprep.mubr.f32.mxu0 0.0
    %v917 = vand.u32 %v101, 4294901760
    %918 = vmatmul.mubr.f32.gmra.mrb[0].mxu0 %v917
    %v919 = vpop.f32.mrb[0].mxu0
    %v920 = vadd.f32 %v846, %v919
    %v921 = vpop.f32.mrb[0].mxu0
    %922 = vdwg.mxu0
    %923 = vmatprep.subr.mxu0 0.0
    %v924 = vand.u32 %v98, 4294901760
    %925 = vmatpush1.msra.mxu0 %v924
    %926 = vmatprep.subr.mxu0 0.0
    %927 = vmatpush1.msra.mxu0 0.0
    %928 = vmatprep.subr.mxu0 0.0
    %929 = vmatpush1.msra.mxu0 0.0
    %930 = vmatprep.subr.mxu0 0.0
    %931 = vmatpush1.msra.mxu0 0.0
    %932 = vmatprep.subr.mxu0 0.0
    %933 = vmatpush1.msra.mxu0 0.0
    %934 = vmatprep.subr.mxu0 0.0
    %935 = vmatpush1.msra.mxu0 0.0
    %936 = vmatprep.subr.mxu0 0.0
    %937 = vmatpush1.msra.mxu0 0.0
    %938 = vmatprep.subr.mxu0 0.0
    %939 = vmatpush1.msra.mxu0 0.0
    %940 = vmatprep.subr.mxu0 0.0
    %941 = vmatpush1.msra.mxu0 0.0
    %942 = vmatprep.subr.mxu0 0.0
    %943 = vmatpush1.msra.mxu0 0.0
    %944 = vmatprep.subr.mxu0 0.0
    %945 = vmatpush1.msra.mxu0 0.0
    %946 = vmatprep.subr.mxu0 0.0
    %947 = vmatpush1.msra.mxu0 0.0
    %948 = vmatprep.subr.mxu0 0.0
    %949 = vmatpush1.msra.mxu0 0.0
    %950 = vmatprep.subr.mxu0 0.0
    %951 = vmatpush1.msra.mxu0 0.0
    %952 = vmatprep.subr.mxu0 0.0
    %953 = vmatpush1.msra.mxu0 0.0
    %954 = vmatprep.subr.mxu0 0.0
    %955 = vmatpush1.msra.mxu0 0.0
    %956 = vmatprep.subr.mxu0 0.0
    %957 = vmatpush1.msra.mxu0 0.0
    %958 = vmatprep.subr.mxu0 0.0
    %959 = vmatpush1.msra.mxu0 0.0
    %960 = vmatprep.subr.mxu0 0.0
    %961 = vmatpush1.msra.mxu0 0.0
    %962 = vmatprep.subr.mxu0 0.0
    %963 = vmatpush1.msra.mxu0 0.0
    %964 = vmatprep.subr.mxu0 0.0
    %965 = vmatpush1.msra.mxu0 0.0
    %966 = vmatprep.subr.mxu0 0.0
    %967 = vmatpush1.msra.mxu0 0.0
    %968 = vmatprep.subr.mxu0 0.0
    %969 = vmatpush1.msra.mxu0 0.0
    %970 = vmatprep.subr.mxu0 0.0
    %971 = vmatpush1.msra.mxu0 0.0
    %972 = vmatprep.subr.mxu0 0.0
    %973 = vmatpush1.msra.mxu0 0.0
    %974 = vmatprep.subr.mxu0 0.0
    %975 = vmatpush1.msra.mxu0 0.0
    %976 = vmatprep.subr.mxu0 0.0
    %977 = vmatpush1.msra.mxu0 0.0
    %978 = vmatprep.subr.mxu0 0.0
    %979 = vmatpush1.msra.mxu0 0.0
    %980 = vmatprep.subr.mxu0 0.0
    %981 = vmatpush1.msra.mxu0 0.0
    %982 = vmatprep.subr.mxu0 0.0
    %983 = vmatpush1.msra.mxu0 0.0
    %984 = vmatprep.subr.mxu0 0.0
    %985 = vmatpush1.msra.mxu0 0.0
    %986 = vmatprep.subr.mxu0 0.0
    %987 = vmatpush1.msra.mxu0 0.0
    %988 = vmatprep.mubr.f32.mxu0 0.0
    %v989 = vand.u32 %v101, 4294901760
    %990 = vmatmul.mubr.f32.gmra.mrb[0].mxu0 %v989
    %v991 = vpop.f32.mrb[0].mxu0
    %v992 = vadd.f32 %v920, %v991
    %v993 = vpop.f32.mrb[0].mxu0
    %994 = vdwg.mxu0
    %v995 = vld [vmem:[#allocation2] sm:$0x3]
    %v997 = vrot.slane %v992, 7
    %vm999 = vcmask 1040384
    %v1000 = vsel %vm999, %v546, %v997
    %v1001 = vadd.f32 %v995, %v1000
    %vm1002 = vcmask 123904
    %1003 = vst.msk [vmem:[#allocation2] sm:$0x3] %vm1002, %v1001
    // Predicated region
    $region14: #{tpu_custom_call.1} parent=1 // pred_check
      _
    $region15: #{tpu_custom_call.1} parent=1 // pred_check_branch
      %1005 = sbr.rel (0) target = $region17
    $region16: #{tpu_custom_call.1} parent=1 // pred_region
      %s1007 = ssub.s32 32, 32
      %1008 = vsyncadd [#allocation3], %s1007
      %s1010 = sshll.u32 [#allocation2], 4
      %s1011 = int_to_ptr.vmem [resolvable:$true] %s1010
      %1013 = dma.vmem_to_hbm [thread:$0]  %s1011, 32, %s2, [#allocation3]
    $region17: #{tpu_custom_call.1} parent=1 // pred_fallthru
      _
    // Predicated region
    $region18: #{tpu_custom_call.1} parent=1 // pred_check
      _
    $region19: #{tpu_custom_call.1} parent=1 // pred_check_branch
      %1015 = sbr.rel (0) target = $region21
    $region20: #{tpu_custom_call.1} parent=1 // pred_region
      %1016 = dma.done [#allocation3], 32
    $region21: #{tpu_custom_call.1} parent=1 // pred_fallthru
      _
    %1017 = vsyncpa [#allocation3], 1

</llo_original>
